<compile_context>
chip_gen: v7x
topology: tpu7x:2x2x1
jax: 0.10.0
libtpu: 0.0.40
codegen_flags: <defaults>
</compile_context>

<pallas_src>
import jax
import jax.numpy as jnp
from jax.experimental import pallas as pl
from jax.experimental.pallas import tpu as pltpu


def _make_multi_loss_kernel(weights):
    """Build a kernel for `sum_i loss_i * w_i` with the static config weights
    folded in as trace-time constants (w == 1.0 -> no multiply emitted)."""

    def kernel(*refs):
        loss_refs = refs[:-1]      # each: SMEM (1,) f32
        total_ref = refs[-1]       # SMEM (1,) f32
        total = None
        for w, ref in zip(weights, loss_refs):
            term = ref[0] if w == 1.0 else ref[0] * w
            total = term if total is None else total + term
        total_ref[0] = total

    return kernel


class MultiLossNet:
    """JAX/Pallas port of sgt.meta_arch.loss.MultiLossNet (forward only)."""

    def __init__(self, node_cls_flag=True, edge_cls_loss_weight=1.0,
                 node_cls_loss_weight=1.0):
        self.node_cls_flag = bool(node_cls_flag)
        self.s_det = 1.0
        self.s_edge_cls = float(edge_cls_loss_weight)
        self.s_node_cls = float(node_cls_loss_weight) if self.node_cls_flag else 0.0

        # Static config -> specialize the kernel arity and constants.
        if self.node_cls_flag:
            weights = (self.s_det, self.s_edge_cls, self.s_node_cls)
        else:
            weights = (self.s_det, self.s_edge_cls)
        n = len(weights)

        n_muls = sum(1 for w in weights if w != 1.0)
        n_adds = n - 1
        flops = max(n_muls + n_adds, 1)

        pallas_fn = pl.pallas_call(
            _make_multi_loss_kernel(weights),
            out_shape=jax.ShapeDtypeStruct((1,), jnp.float32),
            in_specs=[pl.BlockSpec(memory_space=pltpu.SMEM)] * n,
            out_specs=pl.BlockSpec(memory_space=pltpu.SMEM),
            cost_estimate=pl.CostEstimate(
                flops=flops, transcendentals=0, bytes_accessed=4 * (n + 1)),
        )

        def _total(*losses):
            losses1 = [jnp.asarray(l, jnp.float32).reshape(1) for l in losses]
            return pallas_fn(*losses1)[0]

        # Single dispatch: reshapes + pallas_call + [0] index fuse under jit.
        self._total = jax.jit(_total)

    def __call__(self, det_loss_dict, trk_loss_dict):
        det_loss = det_loss_dict["det_loss"]
        match_loss = trk_loss_dict["edge__loss_match"]

        if self.node_cls_flag:
            node_loss = trk_loss_dict["node__loss_cls"]
            total = self._total(det_loss, match_loss, node_loss)
        else:
            total = self._total(det_loss, match_loss)

        losses = {
            "det_loss": det_loss,
            "edge__loss_match": match_loss,
            "total_loss": total,
        }
        if self.node_cls_flag:
            losses["node__loss_cls"] = trk_loss_dict["node__loss_cls"]
        return losses


if __name__ == "__main__":
    key = jax.random.PRNGKey(0)
    k1, k2, k3 = jax.random.split(key, 3)

    # Synthetic scalar losses (what the detector / GNN heads would produce).
    det_loss = jax.random.uniform(k1, (), jnp.float32) * 2.0
    match_loss = jax.random.uniform(k2, (), jnp.float32)
    node_loss = jax.random.uniform(k3, (), jnp.float32)

    det_loss_dict = {"det_loss": det_loss}
    trk_loss_dict = {"edge__loss_match": match_loss, "node__loss_cls": node_loss}

    # Deterministic "config": node classification enabled, loss weights.
    net = MultiLossNet(node_cls_flag=True,
                       edge_cls_loss_weight=0.5,
                       node_cls_loss_weight=0.25)

    out = net(det_loss_dict, trk_loss_dict)
    out = jax.tree_util.tree_map(jax.block_until_ready, out)

    # Cross-check against pure-JAX reference.
    ref_total = det_loss * 1.0 + match_loss * 0.5 + node_loss * 0.25
    assert jnp.allclose(out["total_loss"], ref_total, rtol=1e-6, atol=1e-6)
    assert jnp.allclose(out["det_loss"], det_loss)
    assert jnp.allclose(out["edge__loss_match"], match_loss)
    assert jnp.allclose(out["node__loss_cls"], node_loss)

    # Also exercise the node_cls_flag=False branch (2-input specialized kernel).
    net2 = MultiLossNet(node_cls_flag=False, edge_cls_loss_weight=0.5)
    out2 = net2(det_loss_dict, trk_loss_dict)
    out2 = jax.tree_util.tree_map(jax.block_until_ready, out2)
    assert jnp.allclose(out2["total_loss"], det_loss + 0.5 * match_loss,
                        rtol=1e-6, atol=1e-6)
    assert "node__loss_cls" not in out2

    print("KERNEL_OK")
</pallas_src>

<mosaic_0001>
module attributes {stable_mosaic.version = 11 : i64} {
  func.func @kernel(%arg0: memref<1xf32, #tpu.memory_space<smem>>, %arg1: memref<1xf32, #tpu.memory_space<smem>>, %arg2: memref<1xf32, #tpu.memory_space<smem>>, %arg3: memref<1xf32, #tpu.memory_space<smem>>) attributes {dimension_semantics = [], scalar_prefetch = 0 : i64, scratch_operands = 0 : i64, tpu.core_type = #tpu.core_type<tc>} {
    %c0 = arith.constant 0 : index
    %0 = memref.load %arg0[%c0] : memref<1xf32, #tpu.memory_space<smem>>
    %c0_0 = arith.constant 0 : index
    %1 = memref.load %arg1[%c0_0] : memref<1xf32, #tpu.memory_space<smem>>
    %cst = arith.constant 5.000000e-01 : f32
    %2 = arith.mulf %1, %cst : f32
    %3 = arith.addf %0, %2 : f32
    %c0_1 = arith.constant 0 : index
    %4 = memref.load %arg2[%c0_1] : memref<1xf32, #tpu.memory_space<smem>>
    %cst_2 = arith.constant 2.500000e-01 : f32
    %5 = arith.mulf %4, %cst_2 : f32
    %6 = arith.addf %3, %5 : f32
    %c0_3 = arith.constant 0 : index
    %7 = memref.load %arg3[%c0_3] : memref<1xf32, #tpu.memory_space<smem>>
    memref.store %6, %arg3[%c0_3] : memref<1xf32, #tpu.memory_space<smem>>
    return
  }
}

</mosaic_0001>

<llo_original>
// kernel: _total.1
$region0: #{_total.1}
  #allocation0 [shape = 'u32[]', space=smem, size = 0x4, offset = 0x4, fixed_abs, tag = 'smem constant byte address 0x4 - core index']
  #allocation1 [shape = 'u32[144,128]{1,0:T(1,128)}', space=vmem, size = 0x12000, scoped, tag = 'internal scratch']
  #allocation2 [shape = 'f32[1]{0:T(128)S(6)}', space=smem, size = 0x200, scoped, tag = 'scoped memory for _total.1']
  #allocation3 [shape = 'f32[1]{0:T(128)S(6)}', space=smem, size = 0x200, scoped, tag = 'scoped memory for _total.1']
  #allocation4 [shape = 'f32[1]{0:T(128)S(6)}', space=smem, size = 0x200, scoped, tag = 'scoped memory for _total.1']
  %s0 = inlined_call_operand.<no memory space> [shape: f32[1], index: 0, kind: input, shape index: {}]
  %s1 = inlined_call_operand.<no memory space> [shape: f32[1], index: 1, kind: input, shape index: {}]
  %s2 = inlined_call_operand.<no memory space> [shape: f32[1], index: 2, kind: input, shape index: {}]
  %s3 = inlined_call_operand.hbm [shape: f32[1], index: 3, kind: output, shape index: {}]
  %s4 = sld [smem:[#allocation0]]
  $region22: #{_total.1} parent=0
    _
  %s6 = ssub.s32 1, %s4
  %s7 = scalar_select 0, %s6, %s4
  %8 = sst [smem:[#allocation2]] %s0
  %9 = sst [smem:[#allocation3]] %s1
  %10 = sst [smem:[#allocation4]] %s2
  $region1: #{_total.1} parent=0
    #allocation5 [shape = 'u8[512]{0}', space=smem, size = 0x200, scoped, tag = 'output window, operand 0, single buffered']
    #allocation6 [shape = 's32[1]{0}', space=sflag, size = 0x4, scoped, tag = 'scoped memory for _total.1']
    %11 = vsyncpa [#allocation6], 0
    // Predicated region
    $region2: #{_total.1} parent=1 // pred_check
      _
    $region3: #{_total.1} parent=1 // pred_check_branch
      %13 = sbr.rel (0) target = $region5
    $region4: #{_total.1} parent=1 // pred_region
      _
    $region5: #{_total.1} parent=1 // pred_fallthru
      _
    // Predicated region
    $region6: #{_total.1} parent=1 // pred_check
      _
    $region7: #{_total.1} parent=1 // pred_check_branch
      %15 = sbr.rel (0) target = $region9
    $region8: #{_total.1} parent=1 // pred_region
      _
    $region9: #{_total.1} parent=1 // pred_fallthru
      _
    // Predicated region
    $region10: #{_total.1} parent=1 // pred_check
      _
    $region11: #{_total.1} parent=1 // pred_check_branch
      %17 = sbr.rel (0) target = $region13
    $region12: #{_total.1} parent=1 // pred_region
      _
    $region13: #{_total.1} parent=1 // pred_fallthru
      _
    %s18 = sld [smem:[#allocation2]]
    %s19 = sld [smem:[#allocation3]]
    %s20 = smul.f32 %s19, 0.5
    %s21 = sadd.f32 %s18, %s20
    %s22 = sld [smem:[#allocation4]]
    %s23 = smul.f32 %s22, 0.25
    %s24 = sadd.f32 %s21, %s23
    %s25 = scalar_lea.smem [#allocation5], 0
    %26 = sst [smem:[%s25]] %s24
    // Predicated region
    $region14: #{_total.1} parent=1 // pred_check
      _
    $region15: #{_total.1} parent=1 // pred_check_branch
      %28 = sbr.rel (0) target = $region17
    $region16: #{_total.1} parent=1 // pred_region
      %s30 = ssub.s32 16, 16
      %31 = vsyncadd [#allocation6], %s30
      %34 = dma.smem_to_hbm [#allocation5], 16, %s3, [#allocation6]
    $region17: #{_total.1} parent=1 // pred_fallthru
      _
    // Predicated region
    $region18: #{_total.1} parent=1 // pred_check
      _
    $region19: #{_total.1} parent=1 // pred_check_branch
      %36 = sbr.rel (0) target = $region21
    $region20: #{_total.1} parent=1 // pred_region
      %37 = dma.done [#allocation6], 16
    $region21: #{_total.1} parent=1 // pred_fallthru
      _
    %38 = sfence
    %39 = vsyncpa [#allocation6], 1

</llo_original>
